<compile_context>
chip_gen: v6e
topology: v6e:2x2x1
jax: 0.10.0
libtpu: 0.0.40
codegen_flags: <defaults>
</compile_context>

<pallas_src>
import math

import jax
import jax.numpy as jnp
from jax.experimental import pallas as pl
from jax.experimental.pallas import tpu as pltpu


# ----------------------------- kernel ---------------------------------------


def _lstm_cell_kernel(xh_ref, w_ref, b_ref, c_ref, hy_ref, cy_ref, psum_ref):
    """One hidden-tile of the fused LSTM cell.

    xh_ref  : [B, K]        bf16  fused [x, h] activations (grid-resident)
    w_ref   : [1, K, 4*TH]  bf16  re-blocked weight tile, columns = [i|f|g|o] of this tile
    b_ref   : [1, 1, 4*TH]  f32   folded bias tile (b_i2h + b_h2h)
    c_ref   : [B, TH]       f32   cell-state tile
    hy_ref  : [B, TH]       bf16  new hidden state tile
    cy_ref  : [B, TH]       f32   new cell state tile
    psum_ref: [4, TH]       f32   per-gate partial sums over the batch axis
    """
    TH = c_ref.shape[1]

    # Single fused MXU matmul (bf16 x bf16 -> f32 accumulation) + folded bias.
    gates = jnp.dot(xh_ref[...], w_ref[0],
                    preferred_element_type=jnp.float32) + b_ref[0]

    # Gate nonlinearities in f32 (EUP). Tile-local gate layout keeps these slices
    # lane-aligned whenever TH is a multiple of 128.
    ingate     = jax.nn.sigmoid(gates[:, 0 * TH:1 * TH])
    forgetgate = jax.nn.sigmoid(gates[:, 1 * TH:2 * TH])
    cellgate   = jnp.tanh(gates[:, 2 * TH:3 * TH])
    outgate    = jax.nn.sigmoid(gates[:, 3 * TH:4 * TH])

    c = c_ref[...]
    cy = forgetgate * c + ingate * cellgate
    hy = outgate * jnp.tanh(cy)

    cy_ref[...] = cy
    hy_ref[...] = hy.astype(hy_ref.dtype)

    # Cheap batch(sublane)-axis partial sums; the tiny cross-lane reduce + divide is
    # finished in the wrapper (keeps the grid axis parallel / megacore-shardable).
    psum_ref[...] = jnp.concatenate([
        jnp.sum(ingate, axis=0, keepdims=True),
        jnp.sum(forgetgate, axis=0, keepdims=True),
        jnp.sum(cellgate, axis=0, keepdims=True),
        jnp.sum(outgate, axis=0, keepdims=True),
    ], axis=0)


# ----------------------- tile sizing / VMEM budgeting ------------------------


def _pick_hidden_tile(hidden_size, K, *, weight_budget_bytes=24 << 20):
    """Largest lane-multiple hidden tile whose streamed weight buffers fit the budget.

    Prefers >=2 tiles (when H allows) so the parallel grid axis can be sharded
    across both TensorCores on v7x. Falls back to the full (small) hidden dim
    when H is not 128-aligned.
    """
    if hidden_size % 128 != 0:
        return hidden_size
    candidates = [th for th in range(128, hidden_size + 1, 128)
                  if hidden_size % th == 0]
    multi = [th for th in candidates if hidden_size // th >= 2]
    if multi:
        candidates = multi
    n_bufs = 3  # conservative: assume triple-buffered weight stream
    fits = [th for th in candidates
            if n_bufs * K * 4 * th * 2 <= weight_budget_bytes]
    return max(fits) if fits else min(candidates)


def _vmem_limit_bytes(B, K, TH, n_weight_bufs):
    """Actual VMEM requirement of the kernel + headroom (portable across v5e/v6e/v7x)."""
    def pad8(n):
        return -(-n // 8) * 8

    w_bytes    = n_weight_bufs * K * 4 * TH * 2          # streamed bf16 weight tiles
    bias_bytes = 2 * pad8(1) * 4 * TH * 4                # f32 bias tiles
    xh_bytes   = 2 * pad8(B) * K * 2                     # resident bf16 activations
    c_bytes    = 2 * pad8(B) * TH * 4
    hy_bytes   = 2 * pad8(B) * TH * 2
    cy_bytes   = 2 * pad8(B) * TH * 4
    psum_bytes = 2 * pad8(4) * TH * 4
    need = w_bytes + bias_bytes + xh_bytes + c_bytes + hy_bytes + cy_bytes + psum_bytes
    # + headroom for compiler internal scratch; floor for tiny shapes, cap well
    # under v7x's 64 MiB physical VMEM per TensorCore.
    return int(min(max(need + (8 << 20), 16 << 20), 48 << 20))


# --------------------------- one-time parameter prep -------------------------


def prepare_lstm_cell_params(w_i2h, b_i2h, w_h2h, b_h2h, *,
                             weight_budget_bytes=24 << 20):
    """One-time prep: fuse i2h/h2h, fold biases, re-block gate columns per hidden tile.

    Weights are stored pre-transposed vs nn.Linear: w_i2h [input_size, 4H],
    w_h2h [hidden_size, 4H], gate order i, f, g, o.
    Tile j of the re-blocked weight holds columns [i_j | f_j | g_j | o_j].
    """
    input_size = w_i2h.shape[0]
    H = w_h2h.shape[0]
    K = input_size + H

    TH = _pick_hidden_tile(H, K, weight_budget_bytes=weight_budget_bytes)
    n_tiles = H // TH

    w_cat = jnp.concatenate([w_i2h, w_h2h], axis=0)                  # [K, 4H]
    b_cat = (b_i2h + b_h2h).astype(jnp.float32)                      # [4H]
    w_r = (w_cat.reshape(K, 4, n_tiles, TH)
                .transpose(2, 0, 1, 3)
                .reshape(n_tiles, K, 4 * TH)
                .astype(jnp.bfloat16))                               # bf16 storage
    b_r = (b_cat.reshape(4, n_tiles, TH)
                .transpose(1, 0, 2)
                .reshape(n_tiles, 1, 4 * TH))                        # f32 bias

    return {
        "w_r": jax.device_put(w_r),
        "b_r": jax.device_put(b_r),
        "TH": int(TH),
        "n_tiles": int(n_tiles),
        "K": int(K),
        "H": int(H),
    }


# ------------------------------ forward wrapper ------------------------------


def lstm_cell_decoder(x, hidden, params):
    """Pallas-backed forward of LSTMCellDecoder.

    x: [B, input_size]; hidden = (h, c), each any shape that flattens to
    [B, hidden_size] (matching the PyTorch .view(x.size(0), -1)).
    params: output of prepare_lstm_cell_params (call once, reuse every step).
    Returns (hy, (hy, cy), (mean_i, mean_f, mean_g, mean_o)),
    hy (bf16) / cy (f32) of shape (1, B, H).
    """
    h, c = hidden
    B = x.shape[0]
    x = x.reshape(B, -1)
    h = h.reshape(B, -1)
    c = c.reshape(B, -1).astype(jnp.float32)

    TH, n_tiles, K, H = params["TH"], params["n_tiles"], params["K"], params["H"]

    xh = jnp.concatenate([x, h], axis=1).astype(jnp.bfloat16)        # [B, K]

    # Deeper buffering for the streamed weight tiles when there are enough tiles
    # to benefit (hides DMA step-boundary bubbles; esp. useful on low-BW v5e).
    if n_tiles >= 3:
        n_weight_bufs = 3
        w_spec = pl.BlockSpec((1, K, 4 * TH), lambda j: (j, 0, 0),
                              pipeline_mode=pl.Buffered(3))
    else:
        n_weight_bufs = 2
        w_spec = pl.BlockSpec((1, K, 4 * TH), lambda j: (j, 0, 0))

    hy, cy, psum = pl.pallas_call(
        _lstm_cell_kernel,
        out_shape=(
            jax.ShapeDtypeStruct((B, H), jnp.bfloat16),              # hy (feeds next-step bf16 xh)
            jax.ShapeDtypeStruct((B, H), jnp.float32),               # cy (carry precision)
            jax.ShapeDtypeStruct((4, H), jnp.float32),               # per-gate batch sums
        ),
        grid_spec=pltpu.PrefetchScalarGridSpec(
            num_scalar_prefetch=0,
            grid=(n_tiles,),
            in_specs=[
                pl.BlockSpec((B, K), lambda j: (0, 0)),              # xh: resident
                w_spec,                                              # weights: streamed
                pl.BlockSpec((1, 1, 4 * TH), lambda j: (j, 0, 0)),   # bias tile
                pl.BlockSpec((B, TH), lambda j: (0, j)),             # c tile
            ],
            out_specs=(
                pl.BlockSpec((B, TH), lambda j: (0, j)),
                pl.BlockSpec((B, TH), lambda j: (0, j)),
                pl.BlockSpec((4, TH), lambda j: (0, j)),
            ),
        ),
        compiler_params=pltpu.CompilerParams(
            dimension_semantics=("parallel",),       # hidden tiles independent -> megacore
            vmem_limit_bytes=_vmem_limit_bytes(B, K, TH, n_weight_bufs),
        ),
    )(xh, params["w_r"], params["b_r"], c)

    means = psum.sum(axis=1) / (B * H)                               # (4,)

    hy = hy[None, ...]   # torch.unsqueeze(hy, 0)
    cy = cy[None, ...]
    return hy, (hy, cy), (means[0], means[1], means[2], means[3])


# ------------------------------- reference / test ----------------------------


def _reference(x, h, c, w_i2h, b_i2h, w_h2h, b_h2h):
    B = x.shape[0]
    x = x.reshape(B, -1)
    h = h.reshape(B, -1)
    c = c.reshape(B, -1)
    H = h.shape[1]
    gates = x @ w_i2h + b_i2h + h @ w_h2h + b_h2h
    i = jax.nn.sigmoid(gates[:, 0 * H:1 * H])
    f = jax.nn.sigmoid(gates[:, 1 * H:2 * H])
    g = jnp.tanh(gates[:, 2 * H:3 * H])
    o = jax.nn.sigmoid(gates[:, 3 * H:4 * H])
    cy = f * c + i * g
    hy = o * jnp.tanh(cy)
    return hy, cy, jnp.array([i.mean(), f.mean(), g.mean(), o.mean()])


def _make_case(key, batch, input_size, hidden_size):
    kx, kh, kc, k1, k2, k3, k4 = jax.random.split(key, 7)
    std = 1.0 / math.sqrt(hidden_size)   # mirrors reset_parameters(): U(-std, std)
    w_i2h = jax.random.uniform(k1, (input_size, 4 * hidden_size), jnp.float32, -std, std)
    b_i2h = jax.random.uniform(k2, (4 * hidden_size,), jnp.float32, -std, std)
    w_h2h = jax.random.uniform(k3, (hidden_size, 4 * hidden_size), jnp.float32, -std, std)
    b_h2h = jax.random.uniform(k4, (4 * hidden_size,), jnp.float32, -std, std)
    x = jax.random.normal(kx, (batch, input_size), jnp.float32)
    h0 = jax.random.normal(kh, (1, batch, hidden_size), jnp.float32)  # arrives (1, B, H)
    c0 = jax.random.normal(kc, (1, batch, hidden_size), jnp.float32)
    return x, h0, c0, w_i2h, b_i2h, w_h2h, b_h2h


def _check(case, atol, weight_budget_bytes=None):
    x, h0, c0, w_i2h, b_i2h, w_h2h, b_h2h = case
    prep_kwargs = {}
    if weight_budget_bytes is not None:
        prep_kwargs["weight_budget_bytes"] = weight_budget_bytes
    params = prepare_lstm_cell_params(w_i2h, b_i2h, w_h2h, b_h2h, **prep_kwargs)

    hy, (hy2, cy), gate_means = lstm_cell_decoder(x, (h0, c0), params)
    jax.block_until_ready((hy, cy, gate_means))

    hy_ref, cy_ref, means_ref = _reference(x, h0, c0, w_i2h, b_i2h, w_h2h, b_h2h)
    # bf16 weight/activation storage (f32 accumulation) + bf16 hy -> looser tolerance.
    assert jnp.allclose(hy[0].astype(jnp.float32), hy_ref, atol=atol), "hy mismatch"
    assert jnp.allclose(cy[0], cy_ref, atol=atol), "cy mismatch"
    assert jnp.allclose(jnp.stack(gate_means), means_ref, atol=atol), "gate means mismatch"


if __name__ == "__main__":
    key = jax.random.PRNGKey(0)
    k_small, k_big, k_forced = jax.random.split(key, 3)

    # Small case (H < 128 -> single hidden tile, block == full array).
    _check(_make_case(k_small, batch=8, input_size=32, hidden_size=32), atol=2e-2)

    # Larger case exercising the VMEM-budgeted tiled path (TH=256, 2 parallel tiles).
    _check(_make_case(k_big, batch=8, input_size=64, hidden_size=512), atol=2e-2)

    # Tight-budget case forcing TH=128 / 4 tiles -> exercises the Buffered(3)
    # triple-buffered weight-stream path at small shapes.
    _check(_make_case(k_forced, batch=8, input_size=64, hidden_size=512), atol=2e-2,
           weight_budget_bytes=1 << 20)

    print("KERNEL_OK")
</pallas_src>

<mosaic_0001>
module attributes {stable_mosaic.version = 11 : i64} {
  func.func @_lstm_cell_kernel(%arg0: i32, %arg1: memref<8x64xbf16, #tpu.memory_space<vmem>>, %arg2: memref<1x64x128xbf16, #tpu.memory_space<vmem>>, %arg3: memref<1x1x128xf32, #tpu.memory_space<vmem>>, %arg4: memref<8x32xf32, #tpu.memory_space<vmem>>, %arg5: memref<8x32xbf16, #tpu.memory_space<vmem>>, %arg6: memref<8x32xf32, #tpu.memory_space<vmem>>, %arg7: memref<4x32xf32, #tpu.memory_space<vmem>>) attributes {dimension_semantics = [#tpu.dimension_semantics<parallel>], iteration_bounds = array<i64: 1>, scalar_prefetch = 0 : i64, scratch_operands = 0 : i64, tpu.core_type = #tpu.core_type<tc>, window_params = [{pipeline_mode = #tpu.pipeline_mode<synchronous>, transform_indices = @transform_0, window_bounds = array<i64: 8, 64>}, {transform_indices = @transform_1, window_bounds = array<i64: 1, 64, 128>}, {transform_indices = @transform_2, window_bounds = array<i64: 1, 1, 128>}, {transform_indices = @transform_3, window_bounds = array<i64: 8, 32>}, {transform_indices = @transform_4, window_bounds = array<i64: 8, 32>}, {transform_indices = @transform_5, window_bounds = array<i64: 8, 32>}, {transform_indices = @transform_6, window_bounds = array<i64: 4, 32>}]} {
    %c0 = arith.constant 0 : index
    %c0_0 = arith.constant 0 : index
    %0 = vector.load %arg1[%c0, %c0_0] : memref<8x64xbf16, #tpu.memory_space<vmem>>, vector<8x64xbf16>
    %c0_1 = arith.constant 0 : index
    %c0_2 = arith.constant 0 : index
    %c0_3 = arith.constant 0 : index
    %1 = vector.load %arg2[%c0_1, %c0_2, %c0_3] : memref<1x64x128xbf16, #tpu.memory_space<vmem>>, vector<1x64x128xbf16>
    %2 = vector.shape_cast %1 : vector<1x64x128xbf16> to vector<64x128xbf16>
    %cst = arith.constant dense<0.000000e+00> : vector<8x128xf32>
    %3 = tpu.matmul %0, %2, %cst {dimension_numbers = #tpu.dot_dimension_numbers<[1], [0], [0], [1], [0, 0, 1, 1], [], []>} : vector<8x64xbf16>, vector<64x128xbf16>, vector<8x128xf32> -> vector<8x128xf32>
    %c0_4 = arith.constant 0 : index
    %c0_5 = arith.constant 0 : index
    %c0_6 = arith.constant 0 : index
    %4 = vector.load %arg3[%c0_4, %c0_5, %c0_6] : memref<1x1x128xf32, #tpu.memory_space<vmem>>, vector<1x1x128xf32>
    %5 = vector.shape_cast %4 : vector<1x1x128xf32> to vector<1x128xf32>
    %6 = vector.broadcast %5 : vector<1x128xf32> to vector<8x128xf32>
    %7 = arith.addf %3, %6 : vector<8x128xf32>
    %8 = vector.extract_strided_slice %7 {offsets = [0, 0], sizes = [8, 32], strides = [1, 1]} : vector<8x128xf32> to vector<8x32xf32>
    %9 = arith.negf %8 : vector<8x32xf32>
    %10 = math.exp %9 : vector<8x32xf32>
    %cst_7 = arith.constant 1.000000e+00 : f32
    %11 = vector.broadcast %cst_7 : f32 to vector<8x32xf32>
    %12 = arith.addf %11, %10 : vector<8x32xf32>
    %13 = arith.divf %11, %12 : vector<8x32xf32>
    %14 = vector.extract_strided_slice %7 {offsets = [0, 32], sizes = [8, 32], strides = [1, 1]} : vector<8x128xf32> to vector<8x32xf32>
    %15 = arith.negf %14 : vector<8x32xf32>
    %16 = math.exp %15 : vector<8x32xf32>
    %cst_8 = arith.constant 1.000000e+00 : f32
    %17 = vector.broadcast %cst_8 : f32 to vector<8x32xf32>
    %18 = arith.addf %17, %16 : vector<8x32xf32>
    %19 = arith.divf %17, %18 : vector<8x32xf32>
    %20 = vector.extract_strided_slice %7 {offsets = [0, 64], sizes = [8, 32], strides = [1, 1]} : vector<8x128xf32> to vector<8x32xf32>
    %21 = math.tanh %20 : vector<8x32xf32>
    %22 = vector.extract_strided_slice %7 {offsets = [0, 96], sizes = [8, 32], strides = [1, 1]} : vector<8x128xf32> to vector<8x32xf32>
    %23 = arith.negf %22 : vector<8x32xf32>
    %24 = math.exp %23 : vector<8x32xf32>
    %cst_9 = arith.constant 1.000000e+00 : f32
    %25 = vector.broadcast %cst_9 : f32 to vector<8x32xf32>
    %26 = arith.addf %25, %24 : vector<8x32xf32>
    %27 = arith.divf %25, %26 : vector<8x32xf32>
    %c0_10 = arith.constant 0 : index
    %c0_11 = arith.constant 0 : index
    %28 = vector.load %arg4[%c0_10, %c0_11] : memref<8x32xf32, #tpu.memory_space<vmem>>, vector<8x32xf32>
    %29 = arith.mulf %19, %28 : vector<8x32xf32>
    %30 = arith.mulf %13, %21 : vector<8x32xf32>
    %31 = arith.addf %29, %30 : vector<8x32xf32>
    %32 = math.tanh %31 : vector<8x32xf32>
    %33 = arith.mulf %27, %32 : vector<8x32xf32>
    %c0_12 = arith.constant 0 : index
    %c0_13 = arith.constant 0 : index
    %34 = vector.load %arg6[%c0_12, %c0_13] : memref<8x32xf32, #tpu.memory_space<vmem>>, vector<8x32xf32>
    tpu.vector_store %arg6[%c0_12, %c0_13], %31 {strides = array<i32>} : memref<8x32xf32, #tpu.memory_space<vmem>>, vector<8x32xf32>,
    %35 = arith.truncf %33 : vector<8x32xf32> to vector<8x32xbf16>
    %c0_14 = arith.constant 0 : index
    %c0_15 = arith.constant 0 : index
    %36 = vector.load %arg5[%c0_14, %c0_15] : memref<8x32xbf16, #tpu.memory_space<vmem>>, vector<8x32xbf16>
    tpu.vector_store %arg5[%c0_14, %c0_15], %35 {strides = array<i32>} : memref<8x32xbf16, #tpu.memory_space<vmem>>, vector<8x32xbf16>,
    %cst_16 = arith.constant dense<0.000000e+00> : vector<32xf32>
    %37 = vector.multi_reduction <add>, %13, %cst_16 [0] : vector<8x32xf32> to vector<32xf32>
    %38 = vector.shape_cast %37 : vector<32xf32> to vector<1x32xf32>
    %cst_17 = arith.constant dense<0.000000e+00> : vector<32xf32>
    %39 = vector.multi_reduction <add>, %19, %cst_17 [0] : vector<8x32xf32> to vector<32xf32>
    %40 = vector.shape_cast %39 : vector<32xf32> to vector<1x32xf32>
    %cst_18 = arith.constant dense<0.000000e+00> : vector<32xf32>
    %41 = vector.multi_reduction <add>, %21, %cst_18 [0] : vector<8x32xf32> to vector<32xf32>
    %42 = vector.shape_cast %41 : vector<32xf32> to vector<1x32xf32>
    %cst_19 = arith.constant dense<0.000000e+00> : vector<32xf32>
    %43 = vector.multi_reduction <add>, %27, %cst_19 [0] : vector<8x32xf32> to vector<32xf32>
    %44 = vector.shape_cast %43 : vector<32xf32> to vector<1x32xf32>
    %45 = tpu.concatenate %38, %40, %42, %44 in 0 : vector<1x32xf32>, vector<1x32xf32>, vector<1x32xf32>, vector<1x32xf32> -> vector<4x32xf32>
    %c0_20 = arith.constant 0 : index
    %c0_21 = arith.constant 0 : index
    %46 = vector.load %arg7[%c0_20, %c0_21] : memref<4x32xf32, #tpu.memory_space<vmem>>, vector<4x32xf32>
    tpu.vector_store %arg7[%c0_20, %c0_21], %45 {strides = array<i32>} : memref<4x32xf32, #tpu.memory_space<vmem>>, vector<4x32xf32>,
    return
  }
  func.func @transform_0(%arg0: i32) -> (i32, i32) {
    %c0_i32 = arith.constant 0 : i32
    %c0_i32_0 = arith.constant 0 : i32
    %c0_i32_1 = arith.constant 0 : i32
    return %c0_i32, %c0_i32_0 : i32, i32
  }
  func.func @transform_1(%arg0: i32) -> (i32, i32, i32) {
    %c0_i32 = arith.constant 0 : i32
    %c0_i32_0 = arith.constant 0 : i32
    %c0_i32_1 = arith.constant 0 : i32
    return %arg0, %c0_i32, %c0_i32_0 : i32, i32, i32
  }
  func.func @transform_2(%arg0: i32) -> (i32, i32, i32) {
    %c0_i32 = arith.constant 0 : i32
    %c0_i32_0 = arith.constant 0 : i32
    %c0_i32_1 = arith.constant 0 : i32
    return %arg0, %c0_i32, %c0_i32_0 : i32, i32, i32
  }
  func.func @transform_3(%arg0: i32) -> (i32, i32) {
    %c0_i32 = arith.constant 0 : i32
    %c0_i32_0 = arith.constant 0 : i32
    return %c0_i32, %arg0 : i32, i32
  }
  func.func @transform_4(%arg0: i32) -> (i32, i32) {
    %c0_i32 = arith.constant 0 : i32
    %c0_i32_0 = arith.constant 0 : i32
    return %c0_i32, %arg0 : i32, i32
  }
  func.func @transform_5(%arg0: i32) -> (i32, i32) {
    %c0_i32 = arith.constant 0 : i32
    %c0_i32_0 = arith.constant 0 : i32
    return %c0_i32, %arg0 : i32, i32
  }
  func.func @transform_6(%arg0: i32) -> (i32, i32) {
    %c0_i32 = arith.constant 0 : i32
    %c0_i32_0 = arith.constant 0 : i32
    return %c0_i32, %arg0 : i32, i32
  }
}

</mosaic_0001>

<llo_original>
// kernel: tpu_custom_call.1
$region0: #{tpu_custom_call.1}
  #allocation0 [shape = 'u32[]', space=smem, size = 0x4, offset = 0x4, fixed_abs, tag = 'smem constant byte address 0x4 - core index']
  #allocation1 [shape = 'u32[144,128]{1,0:T(1,128)}', space=vmem, size = 0x12000, scoped, tag = 'internal scratch']
  %s0 = inlined_call_operand.hbm [shape: bf16[8,64], index: 0, kind: input, shape index: {}]
  %s1 = inlined_call_operand.hbm [shape: bf16[1,64,128], index: 1, kind: input, shape index: {}]
  %s2 = inlined_call_operand.vmem [shape: f32[1,1,128], index: 2, kind: input, shape index: {}]
  %s3 = inlined_call_operand.hbm [shape: f32[8,32], index: 3, kind: input, shape index: {}]
  %s4 = inlined_call_operand.hbm [shape: bf16[8,32], index: 4, kind: output, shape index: {0}]
  %s5 = inlined_call_operand.hbm [shape: f32[8,32], index: 5, kind: output, shape index: {1}]
  %s6 = inlined_call_operand.hbm [shape: f32[4,32], index: 6, kind: output, shape index: {2}]
  %7 = xla_tuple %s4, %s5, %s6
  %s8 = sld [smem:[#allocation0]]
  $region54: #{tpu_custom_call.1} parent=0
    _
  %s10 = ssub.s32 1, %s8
  %s11 = scalar_select 0, %s10, %s8
  $region1: #{tpu_custom_call.1} parent=0
    #allocation2 [shape = 'u8[2048]{0}', space=vmem, size = 0x800, scoped, tag = 'input window, operand 0, single buffered']
    #allocation3 [shape = 's32[1]{0}', space=sflag, size = 0x4, scoped, tag = 'scoped memory for tpu_custom_call.1']
    #allocation4 [shape = 's32[1]{0}', space=sflag, size = 0x4, scoped, tag = 'scoped memory for tpu_custom_call.1']
    #allocation5 [shape = 'u8[16384]{0}', space=vmem, size = 0x4000, scoped, tag = 'input window, operand 1, single buffered']
    #allocation6 [shape = 's32[1]{0}', space=sflag, size = 0x4, scoped, tag = 'scoped memory for tpu_custom_call.1']
    #allocation7 [shape = 'u8[4096]{0}', space=vmem, size = 0x1000, scoped, tag = 'input window, operand 3, single buffered']
    #allocation8 [shape = 'u8[2048]{0}', space=vmem, size = 0x800, scoped, tag = 'output window, operand 0, single buffered']
    #allocation9 [shape = 'u8[4096]{0}', space=vmem, size = 0x1000, scoped, tag = 'output window, operand 1, single buffered']
    #allocation10 [shape = 's32[1]{0}', space=sflag, size = 0x4, scoped, tag = 'scoped memory for tpu_custom_call.1']
    #allocation11 [shape = 'u8[2048]{0}', space=vmem, size = 0x800, scoped, tag = 'output window, operand 2, single buffered']
    %12 = vsyncpa [#allocation3], 0
    %13 = vsyncpa [#allocation6], 0
    %14 = vsyncpa [#allocation4], 0
    %15 = vsyncpa [#allocation10], 0
    // Predicated region
    $region2: #{tpu_custom_call.1} parent=1 // pred_check
      _
    $region3: #{tpu_custom_call.1} parent=1 // pred_check_branch
      %17 = sbr.rel (0) target = $region5
    $region4: #{tpu_custom_call.1} parent=1 // pred_region
      %s19 = ssub.s32 64, 64
      %20 = vsyncadd [#allocation3], %s19
      %s22 = sshll.u32 [#allocation2], 4
      %s23 = int_to_ptr.vmem [resolvable:$true] %s22
      %25 = dma.hbm_to_vmem [thread:$0]  %s0, 64, %s23, [#allocation3]
    $region5: #{tpu_custom_call.1} parent=1 // pred_fallthru
      _
    // Predicated region
    $region6: #{tpu_custom_call.1} parent=1 // pred_check
      _
    $region7: #{tpu_custom_call.1} parent=1 // pred_check_branch
      %27 = sbr.rel (0) target = $region9
    $region8: #{tpu_custom_call.1} parent=1 // pred_region
      %s29 = ssub.s32 512, 512
      %30 = vsyncadd [#allocation6], %s29
      %s31 = sshll.u32 [#allocation5], 4
      %s32 = int_to_ptr.vmem [resolvable:$true] %s31
      %37 = dma.hbm_to_vmem [thread:$0]  %s1, 512, %s32, [#allocation6], 64, 64, 4
    $region9: #{tpu_custom_call.1} parent=1 // pred_fallthru
      _
    // Predicated region
    $region10: #{tpu_custom_call.1} parent=1 // pred_check
      _
    $region11: #{tpu_custom_call.1} parent=1 // pred_check_branch
      %39 = sbr.rel (0) target = $region13
    $region12: #{tpu_custom_call.1} parent=1 // pred_region
      _
    $region13: #{tpu_custom_call.1} parent=1 // pred_fallthru
      _
    // Predicated region
    $region14: #{tpu_custom_call.1} parent=1 // pred_check
      _
    $region15: #{tpu_custom_call.1} parent=1 // pred_check_branch
      %41 = sbr.rel (0) target = $region17
    $region16: #{tpu_custom_call.1} parent=1 // pred_region
      %s43 = ssub.s32 128, 128
      %44 = vsyncadd [#allocation6], %s43
      %s46 = sshll.u32 [#allocation7], 4
      %s47 = int_to_ptr.vmem [resolvable:$true] %s46
      %49 = dma.hbm_to_vmem [thread:$0]  %s3, 128, %s47, [#allocation6]
    $region17: #{tpu_custom_call.1} parent=1 // pred_fallthru
      _
    // Predicated region
    $region18: #{tpu_custom_call.1} parent=1 // pred_check
      _
    $region19: #{tpu_custom_call.1} parent=1 // pred_check_branch
      %51 = sbr.rel (0) target = $region21
    $region20: #{tpu_custom_call.1} parent=1 // pred_region
      %52 = dma.done [#allocation3], 64
    $region21: #{tpu_custom_call.1} parent=1 // pred_fallthru
      _
    // Predicated region
    $region22: #{tpu_custom_call.1} parent=1 // pred_check
      _
    $region23: #{tpu_custom_call.1} parent=1 // pred_check_branch
      %54 = sbr.rel (0) target = $region25
    $region24: #{tpu_custom_call.1} parent=1 // pred_region
      %55 = dma.done [#allocation6], 512
    $region25: #{tpu_custom_call.1} parent=1 // pred_fallthru
      _
    // Predicated region
    $region26: #{tpu_custom_call.1} parent=1 // pred_check
      _
    $region27: #{tpu_custom_call.1} parent=1 // pred_check_branch
      %57 = sbr.rel (0) target = $region29
    $region28: #{tpu_custom_call.1} parent=1 // pred_region
      %58 = dma.done [#allocation6], 128
    $region29: #{tpu_custom_call.1} parent=1 // pred_fallthru
      _
    %v60 = vld [vmem:[#allocation2] sm:$0xf]
    %v61 = vld [vmem:[#allocation5] sm:$0xf]
    %v62 = vld [vmem:[#allocation5 + $0x4] sm:$0xf]
    %v63 = vld [vmem:[#allocation5 + $0x8] sm:$0xf]
    %v64 = vld [vmem:[#allocation5 + $0xc] sm:$0xf]
    %v65 = vld [vmem:[#allocation5 + $0x10] sm:$0xf]
    %v66 = vld [vmem:[#allocation5 + $0x14] sm:$0xf]
    %v67 = vld [vmem:[#allocation5 + $0x18] sm:$0xf]
    %v68 = vld [vmem:[#allocation5 + $0x1c] sm:$0xf]
    %v69 = vld [vmem:[%s2] sm:$0x1]
    %v71 = vlaneseq
    %v72 = vshrl.u32 %v71, 7
    %v73 = vsub.s32 0, %v72
    %v74 = vrot.slane %v69, %v73
    %v84 = vunpack.c.l.b16 %v61
    %v85 = vunpack.c.l.b16 %v62
    %v86 = vunpack.c.l.b16 %v63
    %v87 = vunpack.c.l.b16 %v64
    %v88 = vunpack.c.l.b16 %v65
    %v89 = vunpack.c.l.b16 %v66
    %v90 = vunpack.c.l.b16 %v67
    %v91 = vunpack.c.l.b16 %v68
    %v92 = vpack.c.b16 %v85, %v84
    %v93 = vpack.c.b16 %v87, %v86
    %v94 = vpack.c.b16 %v89, %v88
    %v95 = vpack.c.b16 %v91, %v90
    %vm100 = vcmask 523264
    %v102 = vsel %vm100, %v60, 0
    %104 = vmatprep.subr.bf16.mxu0 0
    %105 = vmatpush1.bf16.msra.mxu0 0
    %106 = vmatprep.subr.bf16.mxu0 0
    %107 = vmatpush1.bf16.msra.mxu0 0
    %108 = vmatprep.subr.bf16.mxu0 0
    %109 = vmatpush1.bf16.msra.mxu0 0
    %110 = vmatprep.subr.bf16.mxu0 0
    %111 = vmatpush1.bf16.msra.mxu0 0
    %112 = vmatprep.subr.bf16.mxu0 0
    %113 = vmatpush1.bf16.msra.mxu0 %v95
    %114 = vmatprep.subr.bf16.mxu0 0
    %115 = vmatpush1.bf16.msra.mxu0 %v94
    %116 = vmatprep.subr.bf16.mxu0 0
    %117 = vmatpush1.bf16.msra.mxu0 %v93
    %118 = vmatprep.subr.bf16.mxu0 0
    %119 = vmatpush1.bf16.msra.mxu0 %v92
    %120 = vmatprep.subr.bf16.mxu0 0
    %121 = vmatpush2.bf16.msra.mxu0 0
    %122 = vmatprep.subr.bf16.mxu0 0
    %123 = vmatpush2.bf16.msra.mxu0 0
    %124 = vmatprep.subr.bf16.mxu0 0
    %125 = vmatpush2.bf16.msra.mxu0 0
    %126 = vmatprep.subr.bf16.mxu0 0
    %127 = vmatpush2.bf16.msra.mxu0 0
    %128 = vmatprep.subr.bf16.mxu0 0
    %129 = vmatpush2.bf16.msra.mxu0 0
    %130 = vmatprep.subr.bf16.mxu0 0
    %131 = vmatpush2.bf16.msra.mxu0 0
    %132 = vmatprep.subr.bf16.mxu0 0
    %133 = vmatpush2.bf16.msra.mxu0 0
    %134 = vmatprep.subr.bf16.mxu0 0
    %135 = vmatpush2.bf16.msra.mxu0 0
    %136 = vmatprep.mubr.bf16.mxu0 0
    %137 = vmatmul.mubr.bf16.gmra.mxu0 %v102
    %v138 = vpop.f32.mrf.mxu0
    %v139 = vadd.f32 %v74, %v138
    %v140 = vpop.f32.mrf.mxu0
    %v141 = vpop.f32.mrf.mxu0
    %v142 = vpop.f32.mrf.mxu0
    %143 = vdwg.mxu0
    %v144 = vxor.u32 %v139, 2147483648
    %v145 = vmul.f32 %v144, 1.442695
    %v146 = vpow.pop %v145
    %v147 = vadd.f32 %v146, 1.0
    %v148 = vrcp.pop %v147
    %v149 = vmul.f32 1.0, %v148
    %v150 = vtanh.pop %v139
    %v151 = vld [vmem:[#allocation7] sm:$0xff]
    %153 = vrot.lane.b32.xlu0 %v151, 32
    %v154 = vpop.permute.xlu0 %153
    %v156 = vmul.f32 %v149, %v154
    %158 = vrot.lane.b32.xlu0 %v150, 64
    %v159 = vpop.permute.xlu0 %158
    %v161 = vmul.f32 %v149, %v159
    %163 = vrot.lane.b32.xlu0 %v161, 32
    %v164 = vpop.permute.xlu0 %163
    %v166 = vadd.f32 %v156, %v164
    %v167 = vtanh.pop %v166
    %169 = vrot.lane.b32.xlu0 %v167, 64
    %v170 = vpop.permute.xlu0 %169
    %v172 = vmul.f32 %v149, %v170
    %174 = vrot.lane.b32.xlu0 %v166, 96
    %v175 = vpop.permute.xlu0 %174
    %vm177 = vcmask 261120
    %178 = vst.msk [vmem:[#allocation9] sm:$0xff] %vm177, %v175
    %v179 = vpack.c.bf16 %v172, %v172
    %v181 = vunpack.c.l.b16 %v179
    %v182 = vpack.c.b16 %v181, %v181
    %183 = vrot.lane.b32.xlu0 %v182, 32
    %v184 = vpop.permute.xlu0 %183
    %vm186 = vcmask 257024
    %187 = vst.msk [vmem:[#allocation8] sm:$0xf] %vm186, %v184
    %v188 = vsel %vm177, %v149, 0.0
    %v189 = vrot.slane %v188, 4
    %v190 = vadd.f32 %v188, %v189
    %v191 = vrot.slane %v190, 2
    %v192 = vadd.f32 %v190, %v191
    %v193 = vrot.slane %v192, 1
    %v194 = vadd.f32 %v192, %v193
    %vm195 = vcmask 523520
    %v196 = vsel %vm195, %v149, 0.0
    %v197 = vrot.slane %v196, 4
    %v198 = vadd.f32 %v196, %v197
    %v199 = vrot.slane %v198, 2
    %v200 = vadd.f32 %v198, %v199
    %v201 = vrot.slane %v200, 1
    %v202 = vadd.f32 %v200, %v201
    %vm203 = vcmask 785920
    %v204 = vsel %vm203, %v150, 0.0
    %v205 = vrot.slane %v204, 4
    %v206 = vadd.f32 %v204, %v205
    %v207 = vrot.slane %v206, 2
    %v208 = vadd.f32 %v206, %v207
    %v209 = vrot.slane %v208, 1
    %v210 = vadd.f32 %v208, %v209
    %vm211 = vcmask 1048320
    %v212 = vsel %vm211, %v149, 0.0
    %v213 = vrot.slane %v212, 4
    %v214 = vadd.f32 %v212, %v213
    %v215 = vrot.slane %v214, 2
    %v216 = vadd.f32 %v214, %v215
    %v217 = vrot.slane %v216, 1
    %v218 = vadd.f32 %v216, %v217
    %220 = vrot.lane.b32.xlu0 %v202, 96
    %v221 = vpop.permute.xlu0 %220
    %224 = vrot.lane.b32.xlu0 %v210, 64
    %v225 = vpop.permute.xlu0 %224
    %228 = vrot.lane.b32.xlu0 %v218, 32
    %v229 = vpop.permute.xlu0 %228
    %vm231 = vcmask 1040384
    %v232 = vsel %vm231, %v194, %v221
    %vm233 = vcmask 1041408
    %v234 = vsel %vm233, %v232, %v225
    %vm235 = vcmask 1042432
    %v236 = vsel %vm235, %v234, %v229
    %237 = vst.msk [vmem:[#allocation11] sm:$0xf] %vm186, %v236
    // Predicated region
    $region30: #{tpu_custom_call.1} parent=1 // pred_check
      _
    $region31: #{tpu_custom_call.1} parent=1 // pred_check_branch
      %239 = sbr.rel (0) target = $region33
    $region32: #{tpu_custom_call.1} parent=1 // pred_region
      %s241 = ssub.s32 64, 64
      %242 = vsyncadd [#allocation4], %s241
      %s244 = sshll.u32 [#allocation8], 4
      %s245 = int_to_ptr.vmem [resolvable:$true] %s244
      %247 = dma.vmem_to_hbm [thread:$0]  %s245, 64, %s4, [#allocation4]
    $region33: #{tpu_custom_call.1} parent=1 // pred_fallthru
      _
    // Predicated region
    $region34: #{tpu_custom_call.1} parent=1 // pred_check
      _
    $region35: #{tpu_custom_call.1} parent=1 // pred_check_branch
      %249 = sbr.rel (0) target = $region37
    $region36: #{tpu_custom_call.1} parent=1 // pred_region
      %s251 = ssub.s32 128, 128
      %252 = vsyncadd [#allocation10], %s251
      %s254 = sshll.u32 [#allocation9], 4
      %s255 = int_to_ptr.vmem [resolvable:$true] %s254
      %257 = dma.vmem_to_hbm [thread:$0]  %s255, 128, %s5, [#allocation10]
    $region37: #{tpu_custom_call.1} parent=1 // pred_fallthru
      _
    // Predicated region
    $region38: #{tpu_custom_call.1} parent=1 // pred_check
      _
    $region39: #{tpu_custom_call.1} parent=1 // pred_check_branch
      %259 = sbr.rel (0) target = $region41
    $region40: #{tpu_custom_call.1} parent=1 // pred_region
      %s261 = ssub.s32 64, 64
      %262 = vsyncadd [#allocation10], %s261
      %s264 = sshll.u32 [#allocation11], 4
      %s265 = int_to_ptr.vmem [resolvable:$true] %s264
      %267 = dma.vmem_to_hbm [thread:$0]  %s265, 64, %s6, [#allocation10]
    $region41: #{tpu_custom_call.1} parent=1 // pred_fallthru
      _
    // Predicated region
    $region42: #{tpu_custom_call.1} parent=1 // pred_check
      _
    $region43: #{tpu_custom_call.1} parent=1 // pred_check_branch
      %269 = sbr.rel (0) target = $region45
    $region44: #{tpu_custom_call.1} parent=1 // pred_region
      %270 = dma.done [#allocation4], 64
    $region45: #{tpu_custom_call.1} parent=1 // pred_fallthru
      _
    // Predicated region
    $region46: #{tpu_custom_call.1} parent=1 // pred_check
      _
    $region47: #{tpu_custom_call.1} parent=1 // pred_check_branch
      %272 = sbr.rel (0) target = $region49
    $region48: #{tpu_custom_call.1} parent=1 // pred_region
      %273 = dma.done [#allocation10], 128
    $region49: #{tpu_custom_call.1} parent=1 // pred_fallthru
      _
    // Predicated region
    $region50: #{tpu_custom_call.1} parent=1 // pred_check
      _
    $region51: #{tpu_custom_call.1} parent=1 // pred_check_branch
      %275 = sbr.rel (0) target = $region53
    $region52: #{tpu_custom_call.1} parent=1 // pred_region
      %276 = dma.done [#allocation10], 64
    $region53: #{tpu_custom_call.1} parent=1 // pred_fallthru
      _
    %277 = vsyncpa [#allocation3], 1
    %278 = vsyncpa [#allocation6], 1
    %279 = vsyncpa [#allocation4], 1
    %280 = vsyncpa [#allocation10], 1

</llo_original>
